<compile_context>
chip_gen: v5e
topology: v5e:2x2
jax: 0.10.0
libtpu: 0.0.40
codegen_flags: <defaults>
</compile_context>

<pallas_src>
import functools

import jax
import jax.numpy as jnp
from jax.experimental import pallas as pl
from jax.experimental.pallas import tpu as pltpu


def _round_up(n, m):
    return ((n + m - 1) // m) * m


# --------------------------------------------------------------------------- kernels


def input_proj_kernel(x_ref, whx_ref, bhx_ref, u_ref):
    """u = x @ W_hx + b_hx, batched over all timesteps (one [TM, Ip] tile per grid step)."""
    u_ref[...] = (
        jnp.dot(x_ref[...], whx_ref[...], preferred_element_type=jnp.float32)
        + bhx_ref[...]
    )


def recurrence_kernel(u_ref, whh_ref, bhh_ref, hall_ref, hcarry_ref, *,
                      chunk_len, t_valid, t_padded):
    """h_t = (h_{t-1} + u_t) @ W_hh + b_hh, chunk_len timesteps per grid step.

    u_ref:      (TT, Bp, Hp) f32   precomputed input projections (h0 folded into u[0])
    whh_ref:    (Hp, Hp)     bf16  resident across all chunks (constant index_map)
    bhh_ref:    (1, Hp)      f32   resident across all chunks
    hall_ref:   (TT, Bp, Hp) bf16  per-step hidden states, streamed out
    hcarry_ref: (Bp, Hp)     f32   hidden carry (resident output block, written back once)
    """
    c = pl.program_id(0)

    @pl.when(c == 0)
    def _init():
        hcarry_ref[...] = jnp.zeros_like(hcarry_ref)

    whh = whh_ref[...]
    bhh = bhh_ref[...]
    h = hcarry_ref[...]
    # TODO(synk): for very long sequences, keep W_hh stationary in the MXU via
    # pltpu.matmul_push_rhs / matmul_acc_lhs instead of re-streaming the RHS each step.
    for i in range(chunk_len):
        h_new = jnp.dot((h + u_ref[i]).astype(jnp.bfloat16), whh,
                        preferred_element_type=jnp.float32) + bhh
        if t_padded == t_valid:
            h = h_new
        else:
            step = c * chunk_len + i
            h = jnp.where(step < t_valid, h_new, h)   # padded steps do not advance h
        hall_ref[i] = h.astype(hall_ref.dtype)
    hcarry_ref[...] = h


def output_head_kernel(h_ref, woh_ref, boh_ref, y_ref, *, valid_out):
    """y = log_softmax(h @ W_oh + b_oh) over valid output lanes, batched over timesteps."""
    out = (jnp.dot(h_ref[...], woh_ref[...], preferred_element_type=jnp.float32)
           + boh_ref[...])
    col = jax.lax.broadcasted_iota(jnp.int32, out.shape, 1)
    masked = jnp.where(col < valid_out, out, jnp.float32(-1e30))
    m = jnp.max(masked, axis=1, keepdims=True)
    shifted = masked - m
    lse = jnp.log(jnp.sum(jnp.exp(shifted), axis=1, keepdims=True))
    y_ref[...] = (shifted - lse).astype(y_ref.dtype)


# --------------------------------------------------------------------------- wrapper


def rnn_from_scratch_forward(xs, h0, params, *, chunk=8):
    """Run the RNN cell over a sequence with three Pallas phases.

    xs: [T, B, input_size] f32, h0: [B, hidden_size] f32.
    Returns (y_hat [T, B, output_size], hidden [B, hidden_size]); y_hat[t] / hidden match
    the PyTorch module's outputs when stepped over the sequence (T=1 is the single step).
    """
    T, B, I = xs.shape
    H = params["whh"].shape[0]
    O = params["woh"].shape[1]

    Bp = _round_up(B, 8)
    Ip = _round_up(I, 128)
    Hp = _round_up(H, 128)
    Op = _round_up(O, 128)
    TT = min(chunk, T)            # timesteps per grid step in the recurrence
    Tp = _round_up(T, TT)
    M = Tp * Bp                   # row count for the batched phases
    TM = TT * Bp                  # rows per grid step in the batched phases

    def pad_w(w, r, c):
        return jnp.zeros((r, c), jnp.float32).at[: w.shape[0], : w.shape[1]].set(w)

    def pad_b(b, n):  # b: [1, k]
        return jnp.zeros((1, n), jnp.float32).at[0, : b.shape[1]].set(b[0])

    xs_p = jnp.zeros((Tp, Bp, Ip), jnp.bfloat16).at[:T, :B, :I].set(xs.astype(jnp.bfloat16))
    whx = pad_w(params["whx"], Ip, Hp).astype(jnp.bfloat16)
    whh = pad_w(params["whh"], Hp, Hp).astype(jnp.bfloat16)
    woh = pad_w(params["woh"], Hp, Op).astype(jnp.bfloat16)
    bhx = pad_b(params["bhx"], Hp)
    bhh = pad_b(params["bhh"], Hp)
    boh = pad_b(params["boh"], Op)

    # ---- phase 1: batched input projection u = x @ W_hx + b_hx --------------------------
    u_flat = pl.pallas_call(
        input_proj_kernel,
        out_shape=jax.ShapeDtypeStruct((M, Hp), jnp.float32),
        grid_spec=pltpu.PrefetchScalarGridSpec(
            num_scalar_prefetch=0,
            grid=(M // TM,),
            in_specs=[
                pl.BlockSpec((TM, Ip), lambda i: (i, 0)),     # x rows, streamed
                pl.BlockSpec((Ip, Hp), lambda i: (0, 0)),     # W_hx, resident
                pl.BlockSpec((1, Hp), lambda i: (0, 0)),      # b_hx, resident
            ],
            out_specs=pl.BlockSpec((TM, Hp), lambda i: (i, 0)),
        ),
        compiler_params=pltpu.CompilerParams(dimension_semantics=("parallel",)),
        cost_estimate=pl.CostEstimate(
            flops=2 * M * Ip * Hp, transcendentals=0,
            bytes_accessed=M * Ip * 2 + Ip * Hp * 2 + Hp * 4 + M * Hp * 4),
    )(xs_p.reshape(M, Ip), whx, bhx)

    # Fold the initial hidden into the first timestep: h_1 = (h_0 + u_1) @ W_hh + b_hh.
    h0_p = jnp.zeros((Bp, Hp), jnp.float32).at[:B, :H].set(h0)
    u = u_flat.reshape(Tp, Bp, Hp).at[0].add(h0_p)

    # ---- phase 2: sequential recurrence (the only truly serial work) --------------------
    h_all, h_final = pl.pallas_call(
        functools.partial(recurrence_kernel, chunk_len=TT, t_valid=T, t_padded=Tp),
        out_shape=(
            jax.ShapeDtypeStruct((Tp, Bp, Hp), jnp.bfloat16),
            jax.ShapeDtypeStruct((Bp, Hp), jnp.float32),
        ),
        grid_spec=pltpu.PrefetchScalarGridSpec(
            num_scalar_prefetch=0,
            grid=(Tp // TT,),
            in_specs=[
                pl.BlockSpec((TT, Bp, Hp), lambda c: (c, 0, 0)),   # u chunk, streamed
                pl.BlockSpec((Hp, Hp), lambda c: (0, 0)),          # W_hh, resident
                pl.BlockSpec((1, Hp), lambda c: (0, 0)),           # b_hh, resident
            ],
            out_specs=(
                pl.BlockSpec((TT, Bp, Hp), lambda c: (c, 0, 0)),   # h_all chunk, streamed
                pl.BlockSpec((Bp, Hp), lambda c: (0, 0)),          # hidden carry, written once
            ),
        ),
        compiler_params=pltpu.CompilerParams(dimension_semantics=("arbitrary",)),
        cost_estimate=pl.CostEstimate(
            flops=2 * Tp * Bp * Hp * Hp, transcendentals=0,
            bytes_accessed=(Tp * Bp * Hp * 4 + Hp * Hp * 2 + Hp * 4
                            + Tp * Bp * Hp * 2 + Bp * Hp * 4)),
    )(u, whh, bhh)

    # ---- phase 3: batched output head + masked log-softmax ------------------------------
    y_flat = pl.pallas_call(
        functools.partial(output_head_kernel, valid_out=O),
        out_shape=jax.ShapeDtypeStruct((M, Op), jnp.float32),
        grid_spec=pltpu.PrefetchScalarGridSpec(
            num_scalar_prefetch=0,
            grid=(M // TM,),
            in_specs=[
                pl.BlockSpec((TM, Hp), lambda i: (i, 0)),     # hidden rows, streamed
                pl.BlockSpec((Hp, Op), lambda i: (0, 0)),     # W_oh, resident
                pl.BlockSpec((1, Op), lambda i: (0, 0)),      # b_oh, resident
            ],
            out_specs=pl.BlockSpec((TM, Op), lambda i: (i, 0)),
        ),
        compiler_params=pltpu.CompilerParams(dimension_semantics=("parallel",)),
        cost_estimate=pl.CostEstimate(
            flops=2 * M * Hp * Op, transcendentals=M * (Op + 1),
            bytes_accessed=M * Hp * 2 + Hp * Op * 2 + Op * 4 + M * Op * 4),
    )(h_all.reshape(M, Hp), woh, boh)

    y = y_flat.reshape(Tp, Bp, Op)[:T, :B, :O]
    return y, h_final[:B, :H]


# --------------------------------------------------------------------------- params / ref


def init_params(key, input_size, hidden_size, output_size):
    """Deterministic init mimicking nn.Linear's U(-1/sqrt(fan_in), 1/sqrt(fan_in)).

    Weights stored [in_features, out_features] (transposed vs PyTorch), biases [1, out]."""
    ks = jax.random.split(key, 6)

    def linear(kw, kb, fan_in, fan_out):
        bound = 1.0 / jnp.sqrt(fan_in)
        w = jax.random.uniform(kw, (fan_in, fan_out), jnp.float32, -bound, bound)
        b = jax.random.uniform(kb, (1, fan_out), jnp.float32, -bound, bound)
        return w, b

    whx, bhx = linear(ks[0], ks[1], input_size, hidden_size)
    whh, bhh = linear(ks[2], ks[3], hidden_size, hidden_size)
    woh, boh = linear(ks[4], ks[5], hidden_size, output_size)
    return {"whx": whx, "bhx": bhx, "whh": whh, "bhh": bhh, "woh": woh, "boh": boh}


def reference_forward_seq(xs, h, p, quantize):
    """Pure-JAX reference. quantize=True mimics the kernel's bf16 matmul-operand rounding."""
    q = (lambda v: v.astype(jnp.bfloat16).astype(jnp.float32)) if quantize else (lambda v: v)
    whx, whh, woh = q(p["whx"]), q(p["whh"]), q(p["woh"])
    ys = []
    for t in range(xs.shape[0]):
        whx_x = q(xs[t]) @ whx + p["bhx"]
        h = q(h + whx_x) @ whh + p["bhh"]
        out = q(h) @ woh + p["boh"]
        ys.append(jax.nn.log_softmax(out, axis=1))
    return jnp.stack(ys), h


if __name__ == "__main__":
    input_size, hidden_size, output_size = 16, 32, 8
    batch, seq_len = 2, 8

    key = jax.random.PRNGKey(0)
    k_params, k_x = jax.random.split(key, 2)

    params = init_params(k_params, input_size, hidden_size, output_size)
    xs = jax.random.normal(k_x, (seq_len, batch, input_size), jnp.float32)
    # initHidden() gives zeros; broadcast to batch rows here.
    hidden0 = jnp.zeros((batch, hidden_size), jnp.float32)

    y_seq, h_final = rnn_from_scratch_forward(xs, hidden0, params)
    y_seq, h_final = jax.block_until_ready((y_seq, h_final))

    # Tight check vs. a reference applying the same bf16 operand rounding as the kernel.
    y_ref_q, h_ref_q = reference_forward_seq(xs, hidden0, params, quantize=True)
    assert jnp.allclose(y_seq, y_ref_q, atol=1e-3, rtol=1e-3)
    assert jnp.allclose(h_final, h_ref_q, atol=1e-3, rtol=1e-3)

    # Loose check vs. pure-f32 module math (tolerance loosened for bf16 matmul operands).
    y_ref, h_ref = reference_forward_seq(xs, hidden0, params, quantize=False)
    assert jnp.allclose(y_seq, y_ref, atol=2e-1, rtol=2e-1)
    assert jnp.allclose(h_final, h_ref, atol=2e-1, rtol=2e-1)

    print("KERNEL_OK")
</pallas_src>

<mosaic_0001>
module attributes {stable_mosaic.version = 11 : i64} {
  func.func @input_proj_kernel(%arg0: i32, %arg1: memref<64x128xbf16, #tpu.memory_space<vmem>>, %arg2: memref<128x128xbf16, #tpu.memory_space<vmem>>, %arg3: memref<1x128xf32, #tpu.memory_space<vmem>>, %arg4: memref<64x128xf32, #tpu.memory_space<vmem>>) attributes {dimension_semantics = [#tpu.dimension_semantics<parallel>], iteration_bounds = array<i64: 1>, scalar_prefetch = 0 : i64, scratch_operands = 0 : i64, tpu.core_type = #tpu.core_type<tc>, window_params = [{transform_indices = @transform_0, window_bounds = array<i64: 64, 128>}, {pipeline_mode = #tpu.pipeline_mode<synchronous>, transform_indices = @transform_1, window_bounds = array<i64: 128, 128>}, {pipeline_mode = #tpu.pipeline_mode<synchronous>, transform_indices = @transform_2, window_bounds = array<i64: 1, 128>}, {transform_indices = @transform_3, window_bounds = array<i64: 64, 128>}]} {
    %c0 = arith.constant 0 : index
    %c0_0 = arith.constant 0 : index
    %0 = vector.load %arg1[%c0, %c0_0] : memref<64x128xbf16, #tpu.memory_space<vmem>>, vector<64x128xbf16>
    %c0_1 = arith.constant 0 : index
    %c0_2 = arith.constant 0 : index
    %1 = vector.load %arg2[%c0_1, %c0_2] : memref<128x128xbf16, #tpu.memory_space<vmem>>, vector<128x128xbf16>
    %cst = arith.constant dense<0.000000e+00> : vector<64x128xf32>
    %2 = tpu.matmul %0, %1, %cst {dimension_numbers = #tpu.dot_dimension_numbers<[1], [0], [0], [1], [0, 0, 1, 1], [], []>} : vector<64x128xbf16>, vector<128x128xbf16>, vector<64x128xf32> -> vector<64x128xf32>
    %c0_3 = arith.constant 0 : index
    %c0_4 = arith.constant 0 : index
    %3 = vector.load %arg3[%c0_3, %c0_4] : memref<1x128xf32, #tpu.memory_space<vmem>>, vector<1x128xf32>
    %4 = vector.broadcast %3 : vector<1x128xf32> to vector<64x128xf32>
    %5 = arith.addf %2, %4 : vector<64x128xf32>
    %c0_5 = arith.constant 0 : index
    %c0_6 = arith.constant 0 : index
    %6 = vector.load %arg4[%c0_5, %c0_6] : memref<64x128xf32, #tpu.memory_space<vmem>>, vector<64x128xf32>
    tpu.vector_store %arg4[%c0_5, %c0_6], %5 {strides = array<i32>} : memref<64x128xf32, #tpu.memory_space<vmem>>, vector<64x128xf32>,
    return
  }
  func.func @transform_0(%arg0: i32) -> (i32, i32) {
    %c0_i32 = arith.constant 0 : i32
    %c0_i32_0 = arith.constant 0 : i32
    return %arg0, %c0_i32 : i32, i32
  }
  func.func @transform_1(%arg0: i32) -> (i32, i32) {
    %c0_i32 = arith.constant 0 : i32
    %c0_i32_0 = arith.constant 0 : i32
    %c0_i32_1 = arith.constant 0 : i32
    return %c0_i32, %c0_i32_0 : i32, i32
  }
  func.func @transform_2(%arg0: i32) -> (i32, i32) {
    %c0_i32 = arith.constant 0 : i32
    %c0_i32_0 = arith.constant 0 : i32
    %c0_i32_1 = arith.constant 0 : i32
    return %c0_i32, %c0_i32_0 : i32, i32
  }
  func.func @transform_3(%arg0: i32) -> (i32, i32) {
    %c0_i32 = arith.constant 0 : i32
    %c0_i32_0 = arith.constant 0 : i32
    return %arg0, %c0_i32 : i32, i32
  }
}

</mosaic_0001>

<llo_original>
// kernel: tpu_custom_call.1
$region0: #{tpu_custom_call.1}
  #allocation0 [shape = 'u32[]', space=smem, size = 0x4, offset = 0x4, fixed_abs, tag = 'smem constant byte address 0x4 - core index']
  #allocation1 [shape = 'u32[72,128]{1,0:T(1,128)}', space=vmem, size = 0x9000, scoped, tag = 'internal scratch']
  %s0 = inlined_call_operand.hbm [shape: bf16[64,128], index: 0, kind: input, shape index: {}]
  %s1 = inlined_call_operand.hbm [shape: bf16[128,128], index: 1, kind: input, shape index: {}]
  %s2 = inlined_call_operand.vmem [shape: f32[1,128], index: 2, kind: input, shape index: {}]
  %s3 = inlined_call_operand.hbm [shape: f32[64,128], index: 3, kind: output, shape index: {}]
  %s4 = sld [smem:[#allocation0]]
  $region30: #{tpu_custom_call.1} parent=0
    _
  %s6 = ssub.s32 1, %s4
  %s7 = scalar_select 0, %s6, %s4
  $region1: #{tpu_custom_call.1} parent=0
    #allocation2 [shape = 'u8[16384]{0}', space=vmem, size = 0x4000, scoped, tag = 'input window, operand 0, single buffered']
    #allocation3 [shape = 's32[1]{0}', space=sflag, size = 0x4, scoped, tag = 'scoped memory for tpu_custom_call.1']
    #allocation4 [shape = 's32[1]{0}', space=sflag, size = 0x4, scoped, tag = 'scoped memory for tpu_custom_call.1']
    #allocation5 [shape = 'u8[32768]{0}', space=vmem, size = 0x8000, scoped, tag = 'input window, operand 1, single buffered']
    #allocation6 [shape = 's32[1]{0}', space=sflag, size = 0x4, scoped, tag = 'scoped memory for tpu_custom_call.1']
    #allocation7 [shape = 'u8[32768]{0}', space=vmem, size = 0x8000, scoped, tag = 'output window, operand 0, single buffered']
    %8 = vsyncpa [#allocation3], 0
    %9 = vsyncpa [#allocation6], 0
    %10 = vsyncpa [#allocation4], 0
    // Predicated region
    $region2: #{tpu_custom_call.1} parent=1 // pred_check
      _
    $region3: #{tpu_custom_call.1} parent=1 // pred_check_branch
      %12 = sbr.rel (0) target = $region5
    $region4: #{tpu_custom_call.1} parent=1 // pred_region
      %14 = vsyncadd [#allocation3], 0
      %s15 = sshll.u32 %s0, 4
      %s16 = int_to_ptr.hbm [resolvable:$true] %s15
      %s17 = sshll.u32 [#allocation2], 4
      %s18 = int_to_ptr.vmem [resolvable:$true] %s17
      %23 = dma.hbm_to_vmem [thread:$0]  %s16, 512, %s18, [#allocation3], 64, 64, 4
    $region5: #{tpu_custom_call.1} parent=1 // pred_fallthru
      _
    // Predicated region
    $region6: #{tpu_custom_call.1} parent=1 // pred_check
      _
    $region7: #{tpu_custom_call.1} parent=1 // pred_check_branch
      %25 = sbr.rel (0) target = $region9
    $region8: #{tpu_custom_call.1} parent=1 // pred_region
      %27 = vsyncadd [#allocation6], 0
      %s28 = sshll.u32 %s1, 4
      %s29 = int_to_ptr.hbm [resolvable:$true] %s28
      %s30 = sshll.u32 [#allocation5], 4
      %s31 = int_to_ptr.vmem [resolvable:$true] %s30
      %36 = dma.hbm_to_vmem [thread:$0]  %s29, 1024, %s31, [#allocation6], 64, 64, 4
    $region9: #{tpu_custom_call.1} parent=1 // pred_fallthru
      _
    // Predicated region
    $region10: #{tpu_custom_call.1} parent=1 // pred_check
      _
    $region11: #{tpu_custom_call.1} parent=1 // pred_check_branch
      %38 = sbr.rel (0) target = $region13
    $region12: #{tpu_custom_call.1} parent=1 // pred_region
      _
    $region13: #{tpu_custom_call.1} parent=1 // pred_fallthru
      _
    // Predicated region
    $region14: #{tpu_custom_call.1} parent=1 // pred_check
      _
    $region15: #{tpu_custom_call.1} parent=1 // pred_check_branch
      %40 = sbr.rel (0) target = $region17
    $region16: #{tpu_custom_call.1} parent=1 // pred_region
      %42 = dma.done [#allocation3], 512
    $region17: #{tpu_custom_call.1} parent=1 // pred_fallthru
      _
    // Predicated region
    $region18: #{tpu_custom_call.1} parent=1 // pred_check
      _
    $region19: #{tpu_custom_call.1} parent=1 // pred_check_branch
      %44 = sbr.rel (0) target = $region21
    $region20: #{tpu_custom_call.1} parent=1 // pred_region
      %46 = dma.done [#allocation6], 1024
    $region21: #{tpu_custom_call.1} parent=1 // pred_fallthru
      _
    %v47 = vld [vmem:[#allocation2] sm:$0xf]
    %v48 = vld [vmem:[#allocation2 + $0x4] sm:$0xf]
    %v49 = vld [vmem:[#allocation2 + $0x8] sm:$0xf]
    %v50 = vld [vmem:[#allocation2 + $0xc] sm:$0xf]
    %v51 = vld [vmem:[#allocation2 + $0x10] sm:$0xf]
    %v52 = vld [vmem:[#allocation2 + $0x14] sm:$0xf]
    %v53 = vld [vmem:[#allocation2 + $0x18] sm:$0xf]
    %v54 = vld [vmem:[#allocation2 + $0x1c] sm:$0xf]
    %v55 = vld [vmem:[#allocation5] sm:$0xf]
    %v56 = vld [vmem:[#allocation5 + $0x4] sm:$0xf]
    %v57 = vld [vmem:[#allocation5 + $0x8] sm:$0xf]
    %v58 = vld [vmem:[#allocation5 + $0xc] sm:$0xf]
    %v59 = vld [vmem:[#allocation5 + $0x10] sm:$0xf]
    %v60 = vld [vmem:[#allocation5 + $0x14] sm:$0xf]
    %v61 = vld [vmem:[#allocation5 + $0x18] sm:$0xf]
    %v62 = vld [vmem:[#allocation5 + $0x1c] sm:$0xf]
    %v63 = vld [vmem:[#allocation5 + $0x20] sm:$0xf]
    %v64 = vld [vmem:[#allocation5 + $0x24] sm:$0xf]
    %v65 = vld [vmem:[#allocation5 + $0x28] sm:$0xf]
    %v66 = vld [vmem:[#allocation5 + $0x2c] sm:$0xf]
    %v67 = vld [vmem:[#allocation5 + $0x30] sm:$0xf]
    %v68 = vld [vmem:[#allocation5 + $0x34] sm:$0xf]
    %v69 = vld [vmem:[#allocation5 + $0x38] sm:$0xf]
    %v70 = vld [vmem:[#allocation5 + $0x3c] sm:$0xf]
    %v71 = vld [vmem:[%s2] sm:$0x1]
    %v73 = vperm.slane %v71, 0
    %v83 = vunpack.c.l.b16 %v47
    %v84 = vunpack.c.l.b16 %v48
    %v85 = vunpack.c.l.b16 %v49
    %v86 = vunpack.c.l.b16 %v50
    %v87 = vunpack.c.l.b16 %v51
    %v88 = vunpack.c.l.b16 %v52
    %v89 = vunpack.c.l.b16 %v53
    %v90 = vunpack.c.l.b16 %v54
    %v91 = vpack.c.b16 %v84, %v83
    %v92 = vpack.c.b16 %v86, %v85
    %v93 = vpack.c.b16 %v88, %v87
    %v94 = vpack.c.b16 %v90, %v89
    %v115 = vunpack.c.l.b16 %v55
    %v116 = vunpack.c.l.b16 %v56
    %v117 = vunpack.c.l.b16 %v57
    %v118 = vunpack.c.l.b16 %v58
    %v119 = vunpack.c.l.b16 %v59
    %v120 = vunpack.c.l.b16 %v60
    %v121 = vunpack.c.l.b16 %v61
    %v122 = vunpack.c.l.b16 %v62
    %v123 = vunpack.c.l.b16 %v63
    %v124 = vunpack.c.l.b16 %v64
    %v125 = vunpack.c.l.b16 %v65
    %v126 = vunpack.c.l.b16 %v66
    %v127 = vunpack.c.l.b16 %v67
    %v128 = vunpack.c.l.b16 %v68
    %v129 = vunpack.c.l.b16 %v69
    %v130 = vunpack.c.l.b16 %v70
    %v131 = vpack.c.b16 %v116, %v115
    %v132 = vpack.c.b16 %v118, %v117
    %v133 = vpack.c.b16 %v120, %v119
    %v134 = vpack.c.b16 %v122, %v121
    %v135 = vpack.c.b16 %v124, %v123
    %v136 = vpack.c.b16 %v126, %v125
    %v137 = vpack.c.b16 %v128, %v127
    %v138 = vpack.c.b16 %v130, %v129
    %147 = vmatpush.bf16.msra.mxu0 %v138
    %148 = vmatpush.bf16.msra.mxu0 %v137
    %149 = vmatpush.bf16.msra.mxu0 %v136
    %150 = vmatpush.bf16.msra.mxu0 %v135
    %151 = vmatpush.bf16.msra.mxu0 %v134
    %152 = vmatpush.bf16.msra.mxu0 %v133
    %153 = vmatpush.bf16.msra.mxu0 %v132
    %154 = vmatpush.bf16.msra.mxu0 %v131
    %155 = vmatmul.bf16.gmra.mxu0 %v91
    %v156 = vpop.f32.mrf.mxu0
    %v157 = vadd.f32 %v73, %v156
    %v158 = vpop.f32.mrf.mxu0
    %v159 = vadd.f32 %v73, %v158
    %160 = vmatmul.bf16.gmra.mxu0 %v92
    %v161 = vpop.f32.mrf.mxu0
    %v162 = vadd.f32 %v73, %v161
    %v163 = vpop.f32.mrf.mxu0
    %v164 = vadd.f32 %v73, %v163
    %165 = vmatmul.bf16.gmra.mxu0 %v93
    %v166 = vpop.f32.mrf.mxu0
    %v167 = vadd.f32 %v73, %v166
    %v168 = vpop.f32.mrf.mxu0
    %v169 = vadd.f32 %v73, %v168
    %170 = vmatmul.bf16.gmra.mxu0 %v94
    %v171 = vpop.f32.mrf.mxu0
    %v172 = vadd.f32 %v73, %v171
    %v173 = vpop.f32.mrf.mxu0
    %v174 = vadd.f32 %v73, %v173
    %175 = vdwg.mxu0
    %176 = vst [vmem:[#allocation7] sm:$0xff] %v157
    %177 = vst [vmem:[#allocation7 + $0x8] sm:$0xff] %v159
    %178 = vst [vmem:[#allocation7 + $0x10] sm:$0xff] %v162
    %179 = vst [vmem:[#allocation7 + $0x18] sm:$0xff] %v164
    %180 = vst [vmem:[#allocation7 + $0x20] sm:$0xff] %v167
    %181 = vst [vmem:[#allocation7 + $0x28] sm:$0xff] %v169
    %182 = vst [vmem:[#allocation7 + $0x30] sm:$0xff] %v172
    %183 = vst [vmem:[#allocation7 + $0x38] sm:$0xff] %v174
    // Predicated region
    $region22: #{tpu_custom_call.1} parent=1 // pred_check
      _
    $region23: #{tpu_custom_call.1} parent=1 // pred_check_branch
      %185 = sbr.rel (0) target = $region25
    $region24: #{tpu_custom_call.1} parent=1 // pred_region
      %187 = vsyncadd [#allocation4], 0
      %s188 = sshll.u32 [#allocation7], 4
      %s189 = int_to_ptr.vmem [resolvable:$true] %s188
      %s190 = sshll.u32 %s3, 4
      %s191 = int_to_ptr.hbm [resolvable:$true] %s190
      %196 = dma.vmem_to_hbm [thread:$0]  %s189, 1024, %s191, [#allocation4], 128, 128, 8
    $region25: #{tpu_custom_call.1} parent=1 // pred_fallthru
      _
    // Predicated region
    $region26: #{tpu_custom_call.1} parent=1 // pred_check
      _
    $region27: #{tpu_custom_call.1} parent=1 // pred_check_branch
      %198 = sbr.rel (0) target = $region29
    $region28: #{tpu_custom_call.1} parent=1 // pred_region
      %200 = dma.done [#allocation4], 1024
    $region29: #{tpu_custom_call.1} parent=1 // pred_fallthru
      _
    %201 = vsyncpa [#allocation3], 1
    %202 = vsyncpa [#allocation6], 1
    %203 = vsyncpa [#allocation4], 1

</llo_original>
